<compile_context>
chip_gen: v7x
topology: tpu7x:2x2x1
jax: 0.10.0
libtpu: 0.0.40
codegen_flags: <defaults>
</compile_context>

<pallas_src>
import functools

import jax
import jax.numpy as jnp
from jax.experimental import pallas as pl
from jax.experimental.pallas import tpu as pltpu


# ----------------------------------------------------------------------------
# tiling helper: largest aligned divisor of `n` that is <= target (else n).
# Returned tile always divides n, so grids are exact and full-dim blocks are
# used whenever the dimension is small (keeps the (8,128) rule satisfied).
# ----------------------------------------------------------------------------
def _tile(n, target, align):
    if n <= target:
        return n
    t = (target // align) * align
    while t >= align:
        if n % t == 0:
            return t
        t -= align
    return n


def _gelu_exact(x):
    # exact GELU (timm nn.GELU): 0.5*x*(1+erf(x/sqrt(2)))
    return 0.5 * x * (1.0 + jax.lax.erf(x * 0.7071067811865476))


# ----------------------------------------------------------------------------
# Kernel 1: tiled matmul + bias (+ optional exact GELU)      -- patch embed
# ----------------------------------------------------------------------------
def _mm_bias_kernel(x_ref, w_ref, b_ref, o_ref, acc_ref, *, act):
    @pl.when(pl.program_id(2) == 0)
    def _():
        acc_ref[...] = jnp.zeros_like(acc_ref)

    acc_ref[...] += jnp.dot(
        x_ref[...].astype(jnp.bfloat16), w_ref[...],
        preferred_element_type=jnp.float32)

    @pl.when(pl.program_id(2) == pl.num_programs(2) - 1)
    def _():
        y = acc_ref[...] + b_ref[...]
        if act == "gelu":
            y = _gelu_exact(y)
        o_ref[...] = y.astype(o_ref.dtype)


def matmul_bias(x, w, b, *, act="none", out_dtype=jnp.float32,
                tm_t=256, tn_t=256, tk_t=512):
    M, K = x.shape
    N = w.shape[1]
    tm = _tile(M, tm_t, 8)
    tn = _tile(N, tn_t, 128)
    tk = _tile(K, tk_t, 128)
    return pl.pallas_call(
        functools.partial(_mm_bias_kernel, act=act),
        out_shape=jax.ShapeDtypeStruct((M, N), out_dtype),
        grid=(M // tm, N // tn, K // tk),
        in_specs=[
            pl.BlockSpec((tm, tk), lambda i, j, k: (i, k)),
            pl.BlockSpec((tk, tn), lambda i, j, k: (k, j)),
            pl.BlockSpec((1, tn), lambda i, j, k: (0, j)),
        ],
        out_specs=pl.BlockSpec((tm, tn), lambda i, j, k: (i, j)),
        scratch_shapes=[pltpu.VMEM((tm, tn), jnp.float32)],
        compiler_params=pltpu.CompilerParams(
            dimension_semantics=("parallel", "parallel", "arbitrary")),
    )(x, w, b.reshape(1, N))


# ----------------------------------------------------------------------------
# Kernel 2: fused LayerNorm (full row) + matmul + bias (+ optional GELU)
#           -- used for LN1+QKV and LN2+fc1+GELU
# ----------------------------------------------------------------------------
def _ln_mm_kernel(x_ref, g_ref, be_ref, w_ref, b_ref, o_ref, *, eps, act):
    x = x_ref[...].astype(jnp.float32)
    mu = jnp.mean(x, axis=-1, keepdims=True)
    xc = x - mu
    var = jnp.mean(xc * xc, axis=-1, keepdims=True)
    xn = xc * jax.lax.rsqrt(var + eps) * g_ref[...] + be_ref[...]
    y = jnp.dot(xn.astype(jnp.bfloat16), w_ref[...],
                preferred_element_type=jnp.float32) + b_ref[...]
    if act == "gelu":
        y = _gelu_exact(y)
    o_ref[...] = y.astype(o_ref.dtype)


def ln_matmul_bias(x, g, be, w, b, *, act="none", out_dtype=jnp.bfloat16,
                   eps=1e-6, tm_t=256, tn_t=256):
    M, K = x.shape
    N = w.shape[1]
    tm = _tile(M, tm_t, 8)
    tn = _tile(N, tn_t, 128)
    return pl.pallas_call(
        functools.partial(_ln_mm_kernel, eps=eps, act=act),
        out_shape=jax.ShapeDtypeStruct((M, N), out_dtype),
        grid=(M // tm, N // tn),
        in_specs=[
            pl.BlockSpec((tm, K), lambda i, j: (i, 0)),
            pl.BlockSpec((1, K), lambda i, j: (0, 0)),
            pl.BlockSpec((1, K), lambda i, j: (0, 0)),
            pl.BlockSpec((K, tn), lambda i, j: (0, j)),
            pl.BlockSpec((1, tn), lambda i, j: (0, j)),
        ],
        out_specs=pl.BlockSpec((tm, tn), lambda i, j: (i, j)),
        compiler_params=pltpu.CompilerParams(
            dimension_semantics=("parallel", "parallel")),
    )(x, g.reshape(1, K), be.reshape(1, K), w, b.reshape(1, N))


# ----------------------------------------------------------------------------
# Kernel 3: tiled matmul + bias + LayerScale + residual add
#           -- used for attn-proj and fc2 (writes the f32 residual stream)
# ----------------------------------------------------------------------------
def _mm_ls_res_kernel(x_ref, w_ref, b_ref, ls_ref, r_ref, o_ref, acc_ref):
    @pl.when(pl.program_id(2) == 0)
    def _():
        acc_ref[...] = jnp.zeros_like(acc_ref)

    acc_ref[...] += jnp.dot(
        x_ref[...].astype(jnp.bfloat16), w_ref[...],
        preferred_element_type=jnp.float32)

    @pl.when(pl.program_id(2) == pl.num_programs(2) - 1)
    def _():
        o_ref[...] = r_ref[...] + (acc_ref[...] + b_ref[...]) * ls_ref[...]


def matmul_ls_residual(x, w, b, ls, r, *, tm_t=256, tn_t=256, tk_t=512):
    M, K = x.shape
    N = w.shape[1]
    tm = _tile(M, tm_t, 8)
    tn = _tile(N, tn_t, 128)
    tk = _tile(K, tk_t, 128)
    return pl.pallas_call(
        _mm_ls_res_kernel,
        out_shape=jax.ShapeDtypeStruct((M, N), jnp.float32),
        grid=(M // tm, N // tn, K // tk),
        in_specs=[
            pl.BlockSpec((tm, tk), lambda i, j, k: (i, k)),
            pl.BlockSpec((tk, tn), lambda i, j, k: (k, j)),
            pl.BlockSpec((1, tn), lambda i, j, k: (0, j)),
            pl.BlockSpec((1, tn), lambda i, j, k: (0, j)),
            pl.BlockSpec((tm, tn), lambda i, j, k: (i, j)),
        ],
        out_specs=pl.BlockSpec((tm, tn), lambda i, j, k: (i, j)),
        scratch_shapes=[pltpu.VMEM((tm, tn), jnp.float32)],
        compiler_params=pltpu.CompilerParams(
            dimension_semantics=("parallel", "parallel", "arbitrary")),
    )(x, w, b.reshape(1, N), ls.reshape(1, N), r)


# ----------------------------------------------------------------------------
# Kernel 4: multi-head attention over one batch element per grid step.
# qkv stays in (B, S, 3*dim) layout; q/k/v per head are sliced inside the
# kernel and the output is written directly as a lane-dense (S, dim) slab.
# Padded key positions (token index >= s_valid) are masked with -inf.
# ----------------------------------------------------------------------------
def _attn_kernel(qkv_ref, o_ref, *, heads, dh, scale, s_valid):
    qkv = qkv_ref[0]                       # (S, 3*dim) bf16
    S = qkv.shape[0]
    dim = heads * dh
    key_mask = jnp.where(
        jax.lax.broadcasted_iota(jnp.int32, (1, S), 1) < s_valid,
        0.0, -1e30).astype(jnp.float32)    # (1, S)

    outs = []
    for h in range(heads):
        q = jax.lax.slice_in_dim(qkv, h * dh, (h + 1) * dh, axis=1)
        k = jax.lax.slice_in_dim(qkv, dim + h * dh, dim + (h + 1) * dh, axis=1)
        v = jax.lax.slice_in_dim(qkv, 2 * dim + h * dh, 2 * dim + (h + 1) * dh,
                                 axis=1)
        s = jax.lax.dot_general(
            q, k, (((1,), (1,)), ((), ())),
            preferred_element_type=jnp.float32) * scale       # (S, S)
        s = s + key_mask
        s = s - jnp.max(s, axis=-1, keepdims=True)
        p = jnp.exp(s)
        p = p * pl.reciprocal(jnp.sum(p, axis=-1, keepdims=True), approx=True)
        outs.append(jnp.dot(p.astype(v.dtype), v,
                            preferred_element_type=jnp.float32))
    o_ref[0] = jnp.concatenate(outs, axis=-1).astype(o_ref.dtype)


def attention(qkv, *, heads, dh, s_valid):
    B, S, C3 = qkv.shape
    dim = heads * dh
    return pl.pallas_call(
        functools.partial(_attn_kernel, heads=heads, dh=dh,
                          scale=dh ** -0.5, s_valid=s_valid),
        out_shape=jax.ShapeDtypeStruct((B, S, dim), jnp.bfloat16),
        grid=(B,),
        in_specs=[pl.BlockSpec((1, S, C3), lambda b: (b, 0, 0))],
        out_specs=pl.BlockSpec((1, S, dim), lambda b: (b, 0, 0)),
        compiler_params=pltpu.CompilerParams(
            dimension_semantics=("parallel",)),
    )(qkv)


# ----------------------------------------------------------------------------
# Kernel 5: plain row-tiled LayerNorm (only used on the pooled class tokens)
# ----------------------------------------------------------------------------
def _ln_kernel(x_ref, g_ref, b_ref, o_ref, *, eps):
    x = x_ref[...]
    mu = jnp.mean(x, axis=-1, keepdims=True)
    xc = x - mu
    var = jnp.mean(xc * xc, axis=-1, keepdims=True)
    o_ref[...] = xc * jax.lax.rsqrt(var + eps) * g_ref[...] + b_ref[...]


def layernorm(x, g, b, eps=1e-6):
    M, D = x.shape
    tm = _tile(M, 256, 8)
    return pl.pallas_call(
        functools.partial(_ln_kernel, eps=eps),
        out_shape=jax.ShapeDtypeStruct((M, D), jnp.float32),
        grid=(M // tm,),
        in_specs=[
            pl.BlockSpec((tm, D), lambda i: (i, 0)),
            pl.BlockSpec((1, D), lambda i: (0, 0)),
            pl.BlockSpec((1, D), lambda i: (0, 0)),
        ],
        out_specs=pl.BlockSpec((tm, D), lambda i: (i, 0)),
        compiler_params=pltpu.CompilerParams(
            dimension_semantics=("parallel",)),
    )(x, g.reshape(1, D), b.reshape(1, D))


# ----------------------------------------------------------------------------
# Parameters (synthetic; matmul weights stored as bf16 for MXU + half DMA)
# ----------------------------------------------------------------------------
def init_params(key, *, in_chans, patch, dim, depth, heads, mlp_hidden,
                num_patches, init_values=1e-5):
    def nrm(k, shape, std=0.02):
        return (std * jax.random.normal(k, shape)).astype(jnp.float32)

    keys = jax.random.split(key, 4 + depth)
    params = {
        # conv weight (dim, C, P, P) flattened to (C*P*P, dim) matmul weight
        "patch_w": nrm(keys[0], (in_chans * patch * patch, dim)).astype(jnp.bfloat16),
        "patch_b": jnp.zeros((dim,), jnp.float32),
        "cls_token": nrm(keys[1], (1, 1, dim)),
        "pos_embed": nrm(keys[2], (1, num_patches + 1, dim)),
        "norm_g": jnp.ones((dim,), jnp.float32),
        "norm_b": jnp.zeros((dim,), jnp.float32),
        "blocks": [],
    }
    for d in range(depth):
        bk = jax.random.split(keys[4 + d], 4)
        params["blocks"].append({
            "ln1_g": jnp.ones((dim,), jnp.float32),
            "ln1_b": jnp.zeros((dim,), jnp.float32),
            "qkv_w": nrm(bk[0], (dim, 3 * dim)).astype(jnp.bfloat16),
            "qkv_b": jnp.zeros((3 * dim,), jnp.float32),
            "proj_w": nrm(bk[1], (dim, dim)).astype(jnp.bfloat16),
            "proj_b": jnp.zeros((dim,), jnp.float32),
            "ls1": jnp.full((dim,), init_values, jnp.float32),
            "ln2_g": jnp.ones((dim,), jnp.float32),
            "ln2_b": jnp.zeros((dim,), jnp.float32),
            "fc1_w": nrm(bk[2], (dim, mlp_hidden)).astype(jnp.bfloat16),
            "fc1_b": jnp.zeros((mlp_hidden,), jnp.float32),
            "fc2_w": nrm(bk[3], (mlp_hidden, dim)).astype(jnp.bfloat16),
            "fc2_b": jnp.zeros((dim,), jnp.float32),
            "ls2": jnp.full((dim,), init_values, jnp.float32),
        })
    return params


# ----------------------------------------------------------------------------
# ViT (UNI backbone) forward
# ----------------------------------------------------------------------------
def uni_forward(x, params, *, patch, dim, heads):
    """x: (B, C, H, W) NCHW float32 -> (B, dim) embedding (class token)."""
    B, C, H, W = x.shape
    nH, nW = H // patch, W // patch
    N = nH * nW
    Dh = dim // heads

    # --- patch embed: conv(stride=patch) == matmul on flattened patches -----
    patches = x.reshape(B, C, nH, patch, nW, patch)
    patches = patches.transpose(0, 2, 4, 1, 3, 5).reshape(B * N, C * patch * patch)
    tok = matmul_bias(patches, params["patch_w"], params["patch_b"],
                      out_dtype=jnp.float32)                 # (B*N, dim)
    tok = tok.reshape(B, N, dim)

    # --- cls token + positional embedding, pad tokens to a multiple of 8 ----
    cls = jnp.broadcast_to(params["cls_token"], (B, 1, dim))
    tok = jnp.concatenate([cls, tok], axis=1) + params["pos_embed"]
    S = N + 1
    S_pad = ((S + 7) // 8) * 8
    if S_pad != S:
        tok = jnp.pad(tok, ((0, 0), (0, S_pad - S), (0, 0)))
    h = tok.reshape(B * S_pad, dim)                          # f32 residual stream

    # --- transformer blocks (pre-norm, LayerScale), fused kernels ------------
    for blk in params["blocks"]:
        # attention branch: LN1+QKV fused, attention, proj+LS+residual fused
        qkv = ln_matmul_bias(h, blk["ln1_g"], blk["ln1_b"],
                             blk["qkv_w"], blk["qkv_b"],
                             act="none", out_dtype=jnp.bfloat16)
        qkv = qkv.reshape(B, S_pad, 3 * dim)
        a = attention(qkv, heads=heads, dh=Dh, s_valid=S)    # (B, S_pad, dim) bf16
        a = a.reshape(B * S_pad, dim)
        h = matmul_ls_residual(a, blk["proj_w"], blk["proj_b"], blk["ls1"], h)

        # MLP branch: LN2+fc1+GELU fused, fc2+LS+residual fused
        g = ln_matmul_bias(h, blk["ln2_g"], blk["ln2_b"],
                           blk["fc1_w"], blk["fc1_b"],
                           act="gelu", out_dtype=jnp.bfloat16)
        h = matmul_ls_residual(g, blk["fc2_w"], blk["fc2_b"], blk["ls2"], h)

    # --- final norm + class-token pooling (num_classes=0 -> Identity head) ---
    cls_tok = h.reshape(B, S_pad, dim)[:, 0]                 # (B, dim)
    return layernorm(cls_tok, params["norm_g"], params["norm_b"])


# ----------------------------------------------------------------------------
if __name__ == "__main__":
    # Scaled-down config (real UNI: img 224, dim 1024, depth 24, heads 16).
    B, C, IMG, P = 2, 3, 32, 16
    DIM, DEPTH, HEADS, MLP = 32, 2, 4, 64
    NUM_PATCHES = (IMG // P) ** 2

    key = jax.random.PRNGKey(0)
    k_x, k_p = jax.random.split(key)
    x = jax.random.normal(k_x, (B, C, IMG, IMG), dtype=jnp.float32)  # NCHW
    params = init_params(
        k_p, in_chans=C, patch=P, dim=DIM, depth=DEPTH, heads=HEADS,
        mlp_hidden=MLP, num_patches=NUM_PATCHES, init_values=1e-5,
    )

    emb = uni_forward(x, params, patch=P, dim=DIM, heads=HEADS)
    emb = jax.block_until_ready(emb)
    assert emb.shape == (B, DIM) and emb.dtype == jnp.float32
    assert bool(jnp.all(jnp.isfinite(emb)))
    print("KERNEL_OK")
</pallas_src>

<mosaic_0001>
module attributes {stable_mosaic.version = 11 : i64} {
  func.func @_mm_bias_kernel(%arg0: i32, %arg1: i32, %arg2: i32, %arg3: memref<8x384xf32, #tpu.memory_space<vmem>>, %arg4: memref<384x32xbf16, #tpu.memory_space<vmem>>, %arg5: memref<1x32xf32, #tpu.memory_space<vmem>>, %arg6: memref<8x32xf32, #tpu.memory_space<vmem>>, %arg7: memref<8x32xf32, #tpu.memory_space<vmem>>) attributes {dimension_semantics = [#tpu.dimension_semantics<parallel>, #tpu.dimension_semantics<parallel>, #tpu.dimension_semantics<arbitrary>], iteration_bounds = array<i64: 1, 1, 2>, scalar_prefetch = 0 : i64, scratch_operands = 1 : i64, tpu.core_type = #tpu.core_type<tc>, window_params = [{transform_indices = @transform_0, window_bounds = array<i64: 8, 384>}, {transform_indices = @transform_1, window_bounds = array<i64: 384, 32>}, {transform_indices = @transform_2, window_bounds = array<i64: 1, 32>}, {transform_indices = @transform_3, window_bounds = array<i64: 8, 32>}]} {
    %c0_i32 = arith.constant 0 : i32
    %0 = arith.cmpi eq, %arg2, %c0_i32 : i32
    %1 = arith.extui %0 : i1 to i32
    %c0_i32_0 = arith.constant 0 : i32
    %2 = arith.cmpi ne, %1, %c0_i32_0 : i32
    scf.if %2 {
      %cst_9 = arith.constant 0.000000e+00 : f32
      %13 = vector.broadcast %cst_9 : f32 to vector<8x32xf32>
      %c0_10 = arith.constant 0 : index
      %c0_11 = arith.constant 0 : index
      %14 = vector.load %arg7[%c0_10, %c0_11] : memref<8x32xf32, #tpu.memory_space<vmem>>, vector<8x32xf32>
      tpu.vector_store %arg7[%c0_10, %c0_11], %13 {strides = array<i32>} : memref<8x32xf32, #tpu.memory_space<vmem>>, vector<8x32xf32>,
    } else {
    }
    %c0 = arith.constant 0 : index
    %c0_1 = arith.constant 0 : index
    %3 = vector.load %arg7[%c0, %c0_1] : memref<8x32xf32, #tpu.memory_space<vmem>>, vector<8x32xf32>
    %c0_2 = arith.constant 0 : index
    %c0_3 = arith.constant 0 : index
    %4 = vector.load %arg3[%c0_2, %c0_3] : memref<8x384xf32, #tpu.memory_space<vmem>>, vector<8x384xf32>
    %5 = arith.truncf %4 : vector<8x384xf32> to vector<8x384xbf16>
    %c0_4 = arith.constant 0 : index
    %c0_5 = arith.constant 0 : index
    %6 = vector.load %arg4[%c0_4, %c0_5] : memref<384x32xbf16, #tpu.memory_space<vmem>>, vector<384x32xbf16>
    %cst = arith.constant dense<0.000000e+00> : vector<8x32xf32>
    %7 = tpu.matmul %5, %6, %cst {dimension_numbers = #tpu.dot_dimension_numbers<[1], [0], [0], [1], [0, 0, 1, 1], [], []>} : vector<8x384xbf16>, vector<384x32xbf16>, vector<8x32xf32> -> vector<8x32xf32>
    %8 = arith.addf %3, %7 : vector<8x32xf32>
    %c0_6 = arith.constant 0 : index
    %c0_7 = arith.constant 0 : index
    %9 = vector.load %arg7[%c0_6, %c0_7] : memref<8x32xf32, #tpu.memory_space<vmem>>, vector<8x32xf32>
    tpu.vector_store %arg7[%c0_6, %c0_7], %8 {strides = array<i32>} : memref<8x32xf32, #tpu.memory_space<vmem>>, vector<8x32xf32>,
    %c1_i32 = arith.constant 1 : i32
    %10 = arith.cmpi eq, %arg2, %c1_i32 : i32
    %11 = arith.extui %10 : i1 to i32
    %c0_i32_8 = arith.constant 0 : i32
    %12 = arith.cmpi ne, %11, %c0_i32_8 : i32
    scf.if %12 {
      %c0_9 = arith.constant 0 : index
      %c0_10 = arith.constant 0 : index
      %13 = vector.load %arg7[%c0_9, %c0_10] : memref<8x32xf32, #tpu.memory_space<vmem>>, vector<8x32xf32>
      %c0_11 = arith.constant 0 : index
      %c0_12 = arith.constant 0 : index
      %14 = vector.load %arg5[%c0_11, %c0_12] : memref<1x32xf32, #tpu.memory_space<vmem>>, vector<1x32xf32>
      %15 = vector.broadcast %14 : vector<1x32xf32> to vector<8x32xf32>
      %16 = arith.addf %13, %15 : vector<8x32xf32>
      %c0_13 = arith.constant 0 : index
      %c0_14 = arith.constant 0 : index
      %17 = vector.load %arg6[%c0_13, %c0_14] : memref<8x32xf32, #tpu.memory_space<vmem>>, vector<8x32xf32>
      tpu.vector_store %arg6[%c0_13, %c0_14], %16 {strides = array<i32>} : memref<8x32xf32, #tpu.memory_space<vmem>>, vector<8x32xf32>,
    } else {
    }
    return
  }
  func.func @transform_0(%arg0: i32, %arg1: i32, %arg2: i32) -> (i32, i32) {
    %c0_i32 = arith.constant 0 : i32
    return %arg0, %arg2 : i32, i32
  }
  func.func @transform_1(%arg0: i32, %arg1: i32, %arg2: i32) -> (i32, i32) {
    %c0_i32 = arith.constant 0 : i32
    return %arg2, %arg1 : i32, i32
  }
  func.func @transform_2(%arg0: i32, %arg1: i32, %arg2: i32) -> (i32, i32) {
    %c0_i32 = arith.constant 0 : i32
    %c0_i32_0 = arith.constant 0 : i32
    return %c0_i32, %arg1 : i32, i32
  }
  func.func @transform_3(%arg0: i32, %arg1: i32, %arg2: i32) -> (i32, i32) {
    %c0_i32 = arith.constant 0 : i32
    return %arg0, %arg1 : i32, i32
  }
}

</mosaic_0001>

<llo_original>
// kernel: tpu_custom_call.1
$region0: #{tpu_custom_call.1}
  #allocation0 [shape = 'u32[]', space=smem, size = 0x4, offset = 0x4, fixed_abs, tag = 'smem constant byte address 0x4 - core index']
  #allocation1 [shape = 'u32[144,128]{1,0:T(1,128)}', space=vmem, size = 0x12000, scoped, tag = 'internal scratch']
  #allocation2 [shape = 'f32[8,32]{1,0:T(8,128)}', space=vmem, size = 0x1000, scoped, tag = 'scratch operand']
  %s0 = inlined_call_operand.vmem [shape: f32[8,768], index: 0, kind: input, shape index: {}]
  %s1 = inlined_call_operand.vmem [shape: bf16[768,32], index: 1, kind: input, shape index: {}]
  %s2 = inlined_call_operand.vmem [shape: f32[1,32], index: 2, kind: input, shape index: {}]
  %s3 = inlined_call_operand.hbm [shape: f32[8,32], index: 3, kind: output, shape index: {}]
  %s4 = sld [smem:[#allocation0]]
  $region53: #{tpu_custom_call.1} parent=0
    _
  %s6 = ssub.s32 1, %s4
  %s7 = scalar_select 0, %s6, %s4
  $region1: #{tpu_custom_call.1} parent=0
    #allocation3 [shape = 'u8[4096]{0}', space=vmem, size = 0x1000, scoped, tag = 'output window, operand 0, single buffered']
    #allocation4 [shape = 's32[2]{0}', space=sflag, size = 0x8, scoped, tag = 'scoped memory for tpu_custom_call.1']
    %8 = vsyncpa [#allocation4], 0
    loop: start=0, step=1, limit=4
    $region2: #{tpu_custom_call.1} parent=1 // loop_pre_header
      _
    $region3: #{tpu_custom_call.1} parent=1 // loop_header
      %s10 = sphi 0, %s14
      %p11 = scmp.ge.s32.totalorder %s10, 4
      %s17 = sphi 0, %s36
      %s18 = sphi 0, %s32
      %s19 = sphi 0, %s28
      %s20 = sphi 0, %s17
      %s21 = sphi 0, %s18
      %s22 = sphi 0, %s19
      %s23 = sphi 0, %s20
      %s24 = sphi 0, %s21
      %s25 = sphi 0, %s22
      %s41 = sphi 0, %s43
      %s44 = sphi 0, %s41
      %s45 = sphi 0, %s44
      %s61 = sphi 0, %s45
      %s69 = sphi 0, %s71
      %s72 = sphi 0, %s69
      %s73 = sphi 0, %s72
      %s89 = sphi 0, %s73
      %s95 = sphi 0, %s97
      %s98 = sphi 0, %s95
      %s99 = sphi 0, %s98
      %s115 = sphi 0, %s99
      %s123 = sphi 0, %s125
      %s126 = sphi 0, %s123
      %s127 = sphi 0, %s126
      %s143 = sphi 0, %s127
    $region4: #{tpu_custom_call.1} parent=1 // loop_header_branch
      %13 = sbr.rel (%p11) target = $region8
    $region5: #{tpu_custom_call.1} parent=1 // loop_body
      %s15 = ssub.s32 %s10, 1
      %s16 = ssub.s32 %s10, 2
      %s26 = sadd.s32 1, %s19
      %p27 = scmp.ge.s32.totalorder %s26, 2
      %s28 = scalar_select %p27, 0, %s26
      %s29 = sadd.s32 1, %s18
      %s30 = scalar_select %p27, %s29, %s18
      %p31 = scmp.ge.s32.totalorder %s30, 1
      %s32 = scalar_select %p31, 0, %s30
      %s33 = sadd.s32 1, %s17
      %s34 = scalar_select %p31, %s33, %s17
      %p35 = scmp.ge.s32.totalorder %s34, 1
      %s36 = scalar_select %p35, 0, %s34
      %s37 = ssub.s32 %s17, %s36
      %s38 = ssub.s32 %s19, %s28
      %s39 = sor.u32 %s37, %s38
      %p40 = scmp.eq.s32.totalorder %s39, 0
      %s42 = sadd.s32 %s41, 1
      %s43 = scalar_select %p40, %s41, %s42
      %p46 = pneg %p40
      %p47 = scmp.eq.s32.totalorder %s10, 1
      %p48 = por %p46, %p47
      %p49 = scmp.ne.s32.totalorder %s41, %s44
      %p50 = scmp.eq.s32.totalorder %s10, 0
      %p51 = por %p49, %p50
      %p52 = scmp.ne.s32.totalorder %s41, %s44
      %p53 = scmp.eq.s32.totalorder %s15, 1
      %p54 = por %p52, %p53
      %p55 = scmp.ne.s32.totalorder %s44, %s45
      %p56 = scmp.eq.s32.totalorder %s15, 0
      %p57 = por %p55, %p56
      %p58 = scmp.ne.s32.totalorder %s44, %s45
      %p59 = scmp.eq.s32.totalorder %s16, 1
      %p60 = por %p58, %p59
      %p62 = scmp.ne.s32.totalorder %s45, %s61
      %p63 = scmp.eq.s32.totalorder %s16, 0
      %p64 = por %p62, %p63
      %s65 = ssub.s32 %s19, %s28
      %s66 = ssub.s32 %s18, %s32
      %s67 = sor.u32 %s65, %s66
      %p68 = scmp.eq.s32.totalorder %s67, 0
      %s70 = sadd.s32 %s69, 1
      %s71 = scalar_select %p68, %s69, %s70
      %p74 = pneg %p68
      %p75 = scmp.eq.s32.totalorder %s10, 1
      %p76 = por %p74, %p75
      %p77 = scmp.ne.s32.totalorder %s69, %s72
      %p78 = scmp.eq.s32.totalorder %s10, 0
      %p79 = por %p77, %p78
      %p80 = scmp.ne.s32.totalorder %s69, %s72
      %p81 = scmp.eq.s32.totalorder %s15, 1
      %p82 = por %p80, %p81
      %p83 = scmp.ne.s32.totalorder %s72, %s73
      %p84 = scmp.eq.s32.totalorder %s15, 0
      %p85 = por %p83, %p84
      %p86 = scmp.ne.s32.totalorder %s72, %s73
      %p87 = scmp.eq.s32.totalorder %s16, 1
      %p88 = por %p86, %p87
      %p90 = scmp.ne.s32.totalorder %s73, %s89
      %p91 = scmp.eq.s32.totalorder %s16, 0
      %p92 = por %p90, %p91
      %s93 = ssub.s32 %s18, %s32
      %p94 = scmp.eq.s32.totalorder %s93, 0
      %s96 = sadd.s32 %s95, 1
      %s97 = scalar_select %p94, %s95, %s96
      %p100 = pneg %p94
      %p101 = scmp.eq.s32.totalorder %s10, 1
      %p102 = por %p100, %p101
      %p103 = scmp.ne.s32.totalorder %s95, %s98
      %p104 = scmp.eq.s32.totalorder %s10, 0
      %p105 = por %p103, %p104
      %p106 = scmp.ne.s32.totalorder %s95, %s98
      %p107 = scmp.eq.s32.totalorder %s15, 1
      %p108 = por %p106, %p107
      %p109 = scmp.ne.s32.totalorder %s98, %s99
      %p110 = scmp.eq.s32.totalorder %s15, 0
      %p111 = por %p109, %p110
      %p112 = scmp.ne.s32.totalorder %s98, %s99
      %p113 = scmp.eq.s32.totalorder %s16, 1
      %p114 = por %p112, %p113
      %p116 = scmp.ne.s32.totalorder %s99, %s115
      %p117 = scmp.eq.s32.totalorder %s16, 0
      %p118 = por %p116, %p117
      %s119 = ssub.s32 %s17, %s36
      %s120 = ssub.s32 %s18, %s32
      %s121 = sor.u32 %s119, %s120
      %p122 = scmp.eq.s32.totalorder %s121, 0
      %s124 = sadd.s32 %s123, 1
      %s125 = scalar_select %p122, %s123, %s124
      %p128 = pneg %p122
      %p129 = scmp.eq.s32.totalorder %s10, 1
      %p130 = por %p128, %p129
      %p131 = scmp.ne.s32.totalorder %s123, %s126
      %p132 = scmp.eq.s32.totalorder %s10, 0
      %p133 = por %p131, %p132
      %p134 = scmp.ne.s32.totalorder %s123, %s126
      %p135 = scmp.eq.s32.totalorder %s15, 1
      %p136 = por %p134, %p135
      %p137 = scmp.ne.s32.totalorder %s126, %s127
      %p138 = scmp.eq.s32.totalorder %s15, 0
      %p139 = por %p137, %p138
      %p140 = scmp.ne.s32.totalorder %s126, %s127
      %p141 = scmp.eq.s32.totalorder %s16, 1
      %p142 = por %p140, %p141
      %p144 = scmp.ne.s32.totalorder %s127, %s143
      %p145 = scmp.eq.s32.totalorder %s16, 0
      %p146 = por %p144, %p145
      %p147 = scmp.le.s32.totalorder 1, %s10
      %p148 = scmp.lt.s32.totalorder %s10, 3
      %p149 = pnand %p147, %p148
      %p150 = pneg %p149
      // Predicated region
      $region9: #{tpu_custom_call.1} parent=5 // pred_check
        _
      $region10: #{tpu_custom_call.1} parent=5 // pred_check_branch
        %152 = sbr.rel (%p149) target = $region12
      $region11: #{tpu_custom_call.1} parent=5 // pred_region
        %s153 = ssub.s32 %s10, 1
        // Predicated region
        $region13: #{tpu_custom_call.1} parent=11 // pred_check
          %p154 = pneg %p111
        $region14: #{tpu_custom_call.1} parent=11 // pred_check_branch
          %156 = sbr.rel (%p154) target = $region16
        $region15: #{tpu_custom_call.1} parent=11 // pred_region
          %p157 = scmp.lt.s32.totalorder %s21, 0
          %s158 = scalar_select %p157, %s21, 0
          %s159 = scalar_lea.vmem %s2, %s158
        $region16: #{tpu_custom_call.1} parent=11 // pred_fallthru
          _
      $region12: #{tpu_custom_call.1} parent=5 // pred_fallthru
        _
      %p160 = scmp.lt.s32.totalorder %s10, 2
      // Predicated region
      $region17: #{tpu_custom_call.1} parent=5 // pred_check
        %p161 = pneg %p160
      $region18: #{tpu_custom_call.1} parent=5 // pred_check_branch
        %163 = sbr.rel (%p161) target = $region20
      $region19: #{tpu_custom_call.1} parent=5 // pred_region
        // Predicated region
        $region21: #{tpu_custom_call.1} parent=19 // pred_check
          %p164 = pneg %p51
        $region22: #{tpu_custom_call.1} parent=19 // pred_check_branch
          %166 = sbr.rel (%p164) target = $region24
        $region23: #{tpu_custom_call.1} parent=19 // pred_region
          %s167 = smul.u32 3, %s19
          %p168 = scmp.lt.s32.totalorder %s17, 0
          %s169 = scalar_select %p168, %s17, 0
          %p170 = scmp.lt.s32.totalorder %s167, 5
          %s171 = scalar_select %p170, %s167, 5
          %s172 = smul.addr %s169, 6
          %s173 = sadd.s32 %s171, %s172
          %s174 = smul.addr %s173, 8
          %s175 = scalar_lea.vmem %s0, %s174
          %s176 = smul.u32 3, %s19
        $region24: #{tpu_custom_call.1} parent=19 // pred_fallthru
          _
        // Predicated region
        $region25: #{tpu_custom_call.1} parent=19 // pred_check
          %p177 = pneg %p79
        $region26: #{tpu_custom_call.1} parent=19 // pred_check_branch
          %179 = sbr.rel (%p177) target = $region28
        $region27: #{tpu_custom_call.1} parent=19 // pred_region
          %s180 = smul.u32 48, %s19
          %p181 = scmp.lt.s32.totalorder %s180, 95
          %s182 = scalar_select %p181, %s180, 95
          %p183 = scmp.lt.s32.totalorder %s18, 0
          %s184 = scalar_select %p183, %s18, 0
          %s185 = sadd.s32 %s184, %s182
          %s186 = smul.addr %s185, 4
          %s187 = scalar_lea.vmem %s1, %s186
          %s188 = smul.u32 48, %s19
        $region28: #{tpu_custom_call.1} parent=19 // pred_fallthru
          _
      $region20: #{tpu_custom_call.1} parent=5 // pred_fallthru
        _
      %p189 = scmp.le.s32.totalorder 1, %s10
      %p190 = scmp.lt.s32.totalorder %s10, 3
      %p191 = pnand %p189, %p190
      %p192 = pneg %p191
      // Predicated region
      $region29: #{tpu_custom_call.1} parent=5 // pred_check
        _
      $region30: #{tpu_custom_call.1} parent=5 // pred_check_branch
        %194 = sbr.rel (%p191) target = $region32
      $region31: #{tpu_custom_call.1} parent=5 // pred_region
        %s195 = ssub.s32 %s10, 1
        %s196 = smul.u32 3, %s22
        %p197 = scmp.lt.s32.totalorder %s20, 0
        %s198 = scalar_select %p197, %s20, 0
        %p199 = scmp.lt.s32.totalorder %s196, 5
        %s200 = scalar_select %p199, %s196, 5
        %s201 = smul.addr %s198, 6
        %s202 = sadd.s32 %s200, %s201
        %s203 = smul.addr %s202, 8
        %s204 = scalar_lea.vmem %s0, %s203
        %p205 = pneg %p57
        %p206 = pneg %p54
        %s207 = smul.u32 48, %s22
        %p208 = scmp.lt.s32.totalorder %s207, 95
        %s209 = scalar_select %p208, %s207, 95
        %p210 = scmp.lt.s32.totalorder %s21, 0
        %s211 = scalar_select %p210, %s21, 0
        %s212 = sadd.s32 %s211, %s209
        %s213 = smul.addr %s212, 4
        %s214 = scalar_lea.vmem %s1, %s213
        %p215 = pneg %p85
        %p216 = pneg %p82
        %p217 = scmp.lt.s32.totalorder %s21, 0
        %s218 = scalar_select %p217, %s21, 0
        %s219 = scalar_lea.vmem %s2, %s218
        %p220 = pneg %p111
        %p221 = pneg %p108
        %p222 = pneg %p139
        %p223 = pneg %p136
        %s224 = smul.u32 3, %s22
        %p225 = scmp.lt.s32.totalorder %s20, 0
        %s226 = scalar_select %p225, %s20, 0
        %p227 = scmp.lt.s32.totalorder %s224, 5
        %s228 = scalar_select %p227, %s224, 5
        %s229 = smul.addr %s226, 6
        %s230 = sadd.s32 %s228, %s229
        %s231 = smul.addr %s230, 8
        %s232 = scalar_lea.vmem %s0, %s231
        %s233 = smul.u32 3, %s22
        %s234 = smul.u32 48, %s22
        %p235 = scmp.lt.s32.totalorder %s234, 95
        %s236 = scalar_select %p235, %s234, 95
        %p237 = scmp.lt.s32.totalorder %s21, 0
        %s238 = scalar_select %p237, %s21, 0
        %s239 = sadd.s32 %s238, %s236
        %s240 = smul.addr %s239, 4
        %s241 = scalar_lea.vmem %s1, %s240
        %s242 = smul.u32 48, %s22
        %p243 = scmp.lt.s32.totalorder %s21, 0
        %s244 = scalar_select %p243, %s21, 0
        %s245 = scalar_lea.vmem %s2, %s244
        %p247 = scmp.eq.s32.totalorder %s22, 0
        // Predicated region
        $region33: #{tpu_custom_call.1} parent=31 // pred_check
          %p248 = pneg %p247
        $region34: #{tpu_custom_call.1} parent=31 // pred_check_branch
          %250 = sbr.rel (%p248) target = $region36
        $region35: #{tpu_custom_call.1} parent=31 // pred_region
          %vm251 = vcmask 261120
          %252 = vst.msk [vmem:[#allocation2] sm:$0xff] %vm251, 0.0
        $region36: #{tpu_custom_call.1} parent=31 // pred_fallthru
          _
        %v253 = vld [vmem:[#allocation2] sm:$0xff]
        %v254 = vld [vmem:[%s232] sm:$0xff]
        %v255 = vld [vmem:[%s232 + $0x8] sm:$0xff]
        %v256 = vld [vmem:[%s232 + $0x10] sm:$0xff]
        %v257 = vpack.c.bf16 %v254, %v254
        %v258 = vpack.c.bf16 %v255, %v255
        %v259 = vpack.c.bf16 %v256, %v256
        %v260 = vld [vmem:[%s241] sm:$0xf]
        %v261 = vld [vmem:[%s241 + $0x4] sm:$0xf]
        %v262 = vld [vmem:[%s241 + $0x8] sm:$0xf]
        %v263 = vld [vmem:[%s241 + $0xc] sm:$0xf]
        %v264 = vld [vmem:[%s241 + $0x10] sm:$0xf]
        %v265 = vld [vmem:[%s241 + $0x14] sm:$0xf]
        %v266 = vld [vmem:[%s241 + $0x18] sm:$0xf]
        %v267 = vld [vmem:[%s241 + $0x1c] sm:$0xf]
        %v268 = vld [vmem:[%s241 + $0x20] sm:$0xf]
        %v269 = vld [vmem:[%s241 + $0x24] sm:$0xf]
        %v270 = vld [vmem:[%s241 + $0x28] sm:$0xf]
        %v271 = vld [vmem:[%s241 + $0x2c] sm:$0xf]
        %v272 = vld [vmem:[%s241 + $0x30] sm:$0xf]
        %v273 = vld [vmem:[%s241 + $0x34] sm:$0xf]
        %v274 = vld [vmem:[%s241 + $0x38] sm:$0xf]
        %v275 = vld [vmem:[%s241 + $0x3c] sm:$0xf]
        %v276 = vld [vmem:[%s241 + $0x40] sm:$0xf]
        %v277 = vld [vmem:[%s241 + $0x44] sm:$0xf]
        %v278 = vld [vmem:[%s241 + $0x48] sm:$0xf]
        %v279 = vld [vmem:[%s241 + $0x4c] sm:$0xf]
        %v280 = vld [vmem:[%s241 + $0x50] sm:$0xf]
        %v281 = vld [vmem:[%s241 + $0x54] sm:$0xf]
        %v282 = vld [vmem:[%s241 + $0x58] sm:$0xf]
        %v283 = vld [vmem:[%s241 + $0x5c] sm:$0xf]
        %v284 = vld [vmem:[%s241 + $0x60] sm:$0xf]
        %v285 = vld [vmem:[%s241 + $0x64] sm:$0xf]
        %v286 = vld [vmem:[%s241 + $0x68] sm:$0xf]
        %v287 = vld [vmem:[%s241 + $0x6c] sm:$0xf]
        %v288 = vld [vmem:[%s241 + $0x70] sm:$0xf]
        %v289 = vld [vmem:[%s241 + $0x74] sm:$0xf]
        %v290 = vld [vmem:[%s241 + $0x78] sm:$0xf]
        %v291 = vld [vmem:[%s241 + $0x7c] sm:$0xf]
        %v292 = vld [vmem:[%s241 + $0x80] sm:$0xf]
        %v293 = vld [vmem:[%s241 + $0x84] sm:$0xf]
        %v294 = vld [vmem:[%s241 + $0x88] sm:$0xf]
        %v295 = vld [vmem:[%s241 + $0x8c] sm:$0xf]
        %v296 = vld [vmem:[%s241 + $0x90] sm:$0xf]
        %v297 = vld [vmem:[%s241 + $0x94] sm:$0xf]
        %v298 = vld [vmem:[%s241 + $0x98] sm:$0xf]
        %v299 = vld [vmem:[%s241 + $0x9c] sm:$0xf]
        %v300 = vld [vmem:[%s241 + $0xa0] sm:$0xf]
        %v301 = vld [vmem:[%s241 + $0xa4] sm:$0xf]
        %v302 = vld [vmem:[%s241 + $0xa8] sm:$0xf]
        %v303 = vld [vmem:[%s241 + $0xac] sm:$0xf]
        %v304 = vld [vmem:[%s241 + $0xb0] sm:$0xf]
        %v305 = vld [vmem:[%s241 + $0xb4] sm:$0xf]
        %v306 = vld [vmem:[%s241 + $0xb8] sm:$0xf]
        %v307 = vld [vmem:[%s241 + $0xbc] sm:$0xf]
        %v356 = vunpack.c.l.b16 %v260
        %v357 = vunpack.c.l.b16 %v261
        %v358 = vunpack.c.l.b16 %v262
        %v359 = vunpack.c.l.b16 %v263
        %v360 = vunpack.c.l.b16 %v264
        %v361 = vunpack.c.l.b16 %v265
        %v362 = vunpack.c.l.b16 %v266
        %v363 = vunpack.c.l.b16 %v267
        %v364 = vunpack.c.l.b16 %v268
        %v365 = vunpack.c.l.b16 %v269
        %v366 = vunpack.c.l.b16 %v270
        %v367 = vunpack.c.l.b16 %v271
        %v368 = vunpack.c.l.b16 %v272
        %v369 = vunpack.c.l.b16 %v273
        %v370 = vunpack.c.l.b16 %v274
        %v371 = vunpack.c.l.b16 %v275
        %v372 = vunpack.c.l.b16 %v276
        %v373 = vunpack.c.l.b16 %v277
        %v374 = vunpack.c.l.b16 %v278
        %v375 = vunpack.c.l.b16 %v279
        %v376 = vunpack.c.l.b16 %v280
        %v377 = vunpack.c.l.b16 %v281
        %v378 = vunpack.c.l.b16 %v282
        %v379 = vunpack.c.l.b16 %v283
        %v380 = vunpack.c.l.b16 %v284
        %v381 = vunpack.c.l.b16 %v285
        %v382 = vunpack.c.l.b16 %v286
        %v383 = vunpack.c.l.b16 %v287
        %v384 = vunpack.c.l.b16 %v288
        %v385 = vunpack.c.l.b16 %v289
        %v386 = vunpack.c.l.b16 %v290
        %v387 = vunpack.c.l.b16 %v291
        %v388 = vunpack.c.l.b16 %v292
        %v389 = vunpack.c.l.b16 %v293
        %v390 = vunpack.c.l.b16 %v294
        %v391 = vunpack.c.l.b16 %v295
        %v392 = vunpack.c.l.b16 %v296
        %v393 = vunpack.c.l.b16 %v297
        %v394 = vunpack.c.l.b16 %v298
        %v395 = vunpack.c.l.b16 %v299
        %v396 = vunpack.c.l.b16 %v300
        %v397 = vunpack.c.l.b16 %v301
        %v398 = vunpack.c.l.b16 %v302
        %v399 = vunpack.c.l.b16 %v303
        %v400 = vunpack.c.l.b16 %v304
        %v401 = vunpack.c.l.b16 %v305
        %v402 = vunpack.c.l.b16 %v306
        %v403 = vunpack.c.l.b16 %v307
        %v404 = vpack.c.b16 %v357, %v356
        %v405 = vpack.c.b16 %v359, %v358
        %v406 = vpack.c.b16 %v361, %v360
        %v407 = vpack.c.b16 %v363, %v362
        %v408 = vpack.c.b16 %v365, %v364
        %v409 = vpack.c.b16 %v367, %v366
        %v410 = vpack.c.b16 %v369, %v368
        %v411 = vpack.c.b16 %v371, %v370
        %v412 = vpack.c.b16 %v373, %v372
        %v413 = vpack.c.b16 %v375, %v374
        %v414 = vpack.c.b16 %v377, %v376
        %v415 = vpack.c.b16 %v379, %v378
        %v416 = vpack.c.b16 %v381, %v380
        %v417 = vpack.c.b16 %v383, %v382
        %v418 = vpack.c.b16 %v385, %v384
        %v419 = vpack.c.b16 %v387, %v386
        %v420 = vpack.c.b16 %v389, %v388
        %v421 = vpack.c.b16 %v391, %v390
        %v422 = vpack.c.b16 %v393, %v392
        %v423 = vpack.c.b16 %v395, %v394
        %v424 = vpack.c.b16 %v397, %v396
        %v425 = vpack.c.b16 %v399, %v398
        %v426 = vpack.c.b16 %v401, %v400
        %v427 = vpack.c.b16 %v403, %v402
        %452 = vmatprep.subr.bf16.mxu0 0
        %453 = vmatpush1.bf16.msra.mxu0 %v404
        %454 = vmatprep.subr.bf16.mxu0 0
        %455 = vmatpush1.bf16.msra.mxu0 %v405
        %456 = vmatprep.subr.bf16.mxu0 0
        %457 = vmatpush1.bf16.msra.mxu0 %v406
        %458 = vmatprep.subr.bf16.mxu0 0
        %459 = vmatpush1.bf16.msra.mxu0 %v407
        %460 = vmatprep.subr.bf16.mxu0 0
        %461 = vmatpush1.bf16.msra.mxu0 %v408
        %462 = vmatprep.subr.bf16.mxu0 0
        %463 = vmatpush1.bf16.msra.mxu0 %v409
        %464 = vmatprep.subr.bf16.mxu0 0
        %465 = vmatpush1.bf16.msra.mxu0 %v410
        %466 = vmatprep.subr.bf16.mxu0 0
        %467 = vmatpush1.bf16.msra.mxu0 %v411
        %468 = vmatprep.subr.bf16.mxu0 0
        %469 = vmatpush1.bf16.msra.mxu0 %v412
        %470 = vmatprep.subr.bf16.mxu0 0
        %471 = vmatpush1.bf16.msra.mxu0 %v413
        %472 = vmatprep.subr.bf16.mxu0 0
        %473 = vmatpush1.bf16.msra.mxu0 %v414
        %474 = vmatprep.subr.bf16.mxu0 0
        %475 = vmatpush1.bf16.msra.mxu0 %v415
        %476 = vmatprep.subr.bf16.mxu0 0
        %477 = vmatpush1.bf16.msra.mxu0 %v416
        %478 = vmatprep.subr.bf16.mxu0 0
        %479 = vmatpush1.bf16.msra.mxu0 %v417
        %480 = vmatprep.subr.bf16.mxu0 0
        %481 = vmatpush1.bf16.msra.mxu0 %v418
        %482 = vmatprep.subr.bf16.mxu0 0
        %483 = vmatpush1.bf16.msra.mxu0 %v419
        %484 = vmatprep.mubr.bf16.mxu0 %v258
        %485 = vmatmul.mubr.bf16.gmra.mrb[0].mxu0 %v257
        %v486 = vpop.f32.mrb[0].mxu0
        %v487 = vadd.f32 0.0, %v486
        %v488 = vpop.f32.mrb[0].mxu0
        %v489 = vpop.f32.mrb[0].mxu0
        %v490 = vpop.f32.mrb[0].mxu0
        %491 = vdwg.mxu0
        %492 = vmatprep.subr.bf16.mxu0 0
        %493 = vmatpush1.bf16.msra.mxu0 %v420
        %494 = vmatprep.subr.bf16.mxu0 0
        %495 = vmatpush1.bf16.msra.mxu0 %v421
        %496 = vmatprep.subr.bf16.mxu0 0
        %497 = vmatpush1.bf16.msra.mxu0 %v422
        %498 = vmatprep.subr.bf16.mxu0 0
        %499 = vmatpush1.bf16.msra.mxu0 %v423
        %500 = vmatprep.subr.bf16.mxu0 0
        %501 = vmatpush1.bf16.msra.mxu0 %v424
        %502 = vmatprep.subr.bf16.mxu0 0
        %503 = vmatpush1.bf16.msra.mxu0 %v425
        %504 = vmatprep.subr.bf16.mxu0 0
        %505 = vmatpush1.bf16.msra.mxu0 %v426
        %506 = vmatprep.subr.bf16.mxu0 0
        %507 = vmatpush1.bf16.msra.mxu0 %v427
        %508 = vmatprep.subr.bf16.mxu0 0
        %509 = vmatpush1.bf16.msra.mxu0 0
        %510 = vmatprep.subr.bf16.mxu0 0
        %511 = vmatpush1.bf16.msra.mxu0 0
        %512 = vmatprep.subr.bf16.mxu0 0
        %513 = vmatpush1.bf16.msra.mxu0 0
        %514 = vmatprep.subr.bf16.mxu0 0
        %515 = vmatpush1.bf16.msra.mxu0 0
        %516 = vmatprep.subr.bf16.mxu0 0
        %517 = vmatpush1.bf16.msra.mxu0 0
        %518 = vmatprep.subr.bf16.mxu0 0
        %519 = vmatpush1.bf16.msra.mxu0 0
        %520 = vmatprep.subr.bf16.mxu0 0
        %521 = vmatpush1.bf16.msra.mxu0 0
        %522 = vmatprep.subr.bf16.mxu0 0
        %523 = vmatpush1.bf16.msra.mxu0 0
        %524 = vmatprep.mubr.bf16.mxu0 0
        %525 = vmatmul.mubr.bf16.gmra.mrb[0].mxu0 %v259
        %v526 = vpop.f32.mrb[0].mxu0
        %v527 = vadd.f32 %v487, %v526
        %v528 = vpop.f32.mrb[0].mxu0
        %v529 = vpop.f32.mrb[0].mxu0
        %v530 = vpop.f32.mrb[0].mxu0
        %531 = vdwg.mxu0
        %v532 = vadd.f32 %v253, %v527
        %vm533 = vcmask 261120
        %534 = vst.msk [vmem:[#allocation2] sm:$0xff] %vm533, %v532
        %p535 = scmp.eq.s32.totalorder %s22, 1
        // Predicated region
        $region37: #{tpu_custom_call.1} parent=31 // pred_check
          %p536 = pneg %p535
        $region38: #{tpu_custom_call.1} parent=31 // pred_check_branch
          %538 = sbr.rel (%p536) target = $region40
        $region39: #{tpu_custom_call.1} parent=31 // pred_region
          %v539 = vld [vmem:[#allocation2] sm:$0xff]
          %v540 = vld [vmem:[%s245] sm:$0x1]
          %v542 = vlaneseq
          %v543 = vshrl.u32 %v542, 7
          %v544 = vsub.s32 0, %v543
          %v545 = vrot.slane %v540, %v544
          %v547 = vadd.f32 %v539, %v545
          %548 = vst.msk [vmem:[#allocation3] sm:$0xff] %vm533, %v547
        $region40: #{tpu_custom_call.1} parent=31 // pred_fallthru
          _
        // Predicated region
        $region41: #{tpu_custom_call.1} parent=31 // pred_check
          %p549 = pneg %p136
        $region42: #{tpu_custom_call.1} parent=31 // pred_check_branch
          %551 = sbr.rel (%p549) target = $region44
        $region43: #{tpu_custom_call.1} parent=31 // pred_region
          %s553 = ssub.s32 128, 128
          %554 = vsyncadd [#allocation4], %s553
          %s555 = sadd.s32 %s21, %s20
          %s556 = smul.addr %s555, 128
          %s557 = scalar_lea.hbm %s3, %s556
          %s559 = sshll.u32 [#allocation3], 4
          %s560 = int_to_ptr.vmem [resolvable:$true] %s559
          %562 = dma.vmem_to_hbm [thread:$0]  %s560, 128, %s557, [#allocation4]
        $region44: #{tpu_custom_call.1} parent=31 // pred_fallthru
          _
        // Predicated region
        $region45: #{tpu_custom_call.1} parent=31 // pred_check
          %p563 = pneg %p136
        $region46: #{tpu_custom_call.1} parent=31 // pred_check_branch
          %565 = sbr.rel (%p563) target = $region48
        $region47: #{tpu_custom_call.1} parent=31 // pred_region
          %566 = dma.done [#allocation4], 128
        $region48: #{tpu_custom_call.1} parent=31 // pred_fallthru
          _
      $region32: #{tpu_custom_call.1} parent=5 // pred_fallthru
        _
      %p567 = scmp.le.s32.totalorder 2, %s10
      // Predicated region
      $region49: #{tpu_custom_call.1} parent=5 // pred_check
        %p568 = pneg %p567
      $region50: #{tpu_custom_call.1} parent=5 // pred_check_branch
        %570 = sbr.rel (%p568) target = $region52
      $region51: #{tpu_custom_call.1} parent=5 // pred_region
        %s571 = ssub.s32 %s10, 2
      $region52: #{tpu_custom_call.1} parent=5 // pred_fallthru
        _
    $region6: #{tpu_custom_call.1} parent=1 // loop_footer
      %s14 = sadd.s32 1, %s10
    $region7: #{tpu_custom_call.1} parent=1 // loop_footer_branch
      %9 = sbr.rel target = $region3
    $region8: #{tpu_custom_call.1} parent=1 // loop_exit
      _
    %572 = vsyncpa [#allocation4], 1
    %s573 = scalar_lea.sflag [#allocation4], 1
    %574 = vsyncpa %s573, 1

</llo_original>
